<compile_context>
chip_gen: v5e
topology: v5e:2x2
jax: 0.10.0
libtpu: 0.0.40
codegen_flags: <defaults>
</compile_context>

<pallas_src>
import jax
import jax.numpy as jnp
from jax.experimental import pallas as pl
from jax.experimental.pallas import tpu as pltpu


def _round_up(x, m):
    return (x + m - 1) // m * m


def _usable_vmem_bytes():
    """Physical VMEM minus headroom for Mosaic internal scratch."""
    try:
        cap = int(pltpu.get_tpu_info().vmem_capacity_bytes)
    except Exception:
        cap = 64 * 1024 * 1024  # conservative default (v7x per-TC VMEM)
    # v7x: 64 MiB -> ~56 MiB usable; v5e/v6e: 128 MiB -> ~112 MiB usable.
    return cap - max(8 * 1024 * 1024, cap // 8)


def _pick_tb(b):
    """Batch tile: multiple of 8, capped at 128/256, >= 2 tiles whenever the
    batch allows (v7x megacore), low batch-padding waste."""
    b8 = _round_up(b, 8)
    cap = 256 if b8 >= 512 else 128
    if b8 <= 8:
        return b8
    if b8 <= 2 * cap:
        return _round_up(-(-b8 // 2), 8)  # split into two tiles
    # Large batch: largest tile <= cap that minimizes padding.
    best_tb, best_waste = cap, _round_up(b8, cap) - b8
    tb = cap - 8
    while tb >= 64 and best_waste > 0:
        waste = _round_up(b8, tb) - b8
        if waste < best_waste:
            best_tb, best_waste = tb, waste
        tb -= 8
    return best_tb


def _combine_epilogue(z, x, out_dtype):
    """Highway combine (all f32): relu proj, sigmoid gate, gated residual."""
    h_pad = z.shape[-1] // 2
    proj = jnp.maximum(z[:, :h_pad], 0.0)
    gate = jax.nn.sigmoid(z[:, h_pad:])
    # out = gate*proj + (1-gate)*x  ==  gate*(proj - x) + x   (one fewer mul)
    return (gate * (proj - x) + x).astype(out_dtype)


def _highway_single_k_kernel(x_ref, w_ref, b_ref, o_ref):
    """grid = (batch_tiles,).  Full weight resident in VMEM; the x tile is
    read from HBM once and reused as both the matmul LHS and the residual."""
    x = x_ref[...].astype(jnp.float32)          # (TB, H)
    h = x.shape[-1]
    h_pad = o_ref.shape[-1]
    if h != h_pad:
        # Lane-pad to H_pad in VMEM (no wrapper-side jnp.pad / HBM round trip).
        x = jnp.concatenate(
            [x, jnp.zeros((x.shape[0], h_pad - h), jnp.float32)], axis=-1)
    z = jnp.dot(x.astype(jnp.bfloat16), w_ref[...],
                preferred_element_type=jnp.float32)   # (TB, 2*H_pad) f32
    z = z + b_ref[...]
    o_ref[...] = _combine_epilogue(z, x, o_ref.dtype)


def _highway_ktiled_kernel(x_k_ref, w_ref, b_ref, o_ref, acc_ref, res_ref):
    """grid = (batch_tiles, k_tiles); reduction axis last.  Incoming x tiles
    are stashed in a VMEM residual scratch so x is streamed from HBM once."""
    k = pl.program_id(1)
    tk = x_k_ref.shape[-1]

    @pl.when(k == 0)
    def _():
        # Init the accumulator with the broadcast bias -> drops a finalize add.
        acc_ref[...] = jnp.broadcast_to(b_ref[...], acc_ref.shape)

    xk = x_k_ref[...].astype(jnp.float32)
    res_ref[:, pl.ds(pl.multiple_of(k * tk, tk), tk)] = xk
    acc_ref[...] += jnp.dot(xk.astype(jnp.bfloat16), w_ref[...],
                            preferred_element_type=jnp.float32)

    @pl.when(k == pl.num_programs(1) - 1)
    def _():
        o_ref[...] = _combine_epilogue(acc_ref[...], res_ref[...], o_ref.dtype)


def prepare_highway_params(w_proj, b_proj, w_gate, b_gate,
                           *, weight_dtype=jnp.bfloat16):
    """Call ONCE at module init.

    Takes PyTorch nn.Linear layouts (out,in)/(out,) and returns a single
    packed weight W_cat (H_pad, 2*H_pad) for `x @ W_cat` (proj columns in the
    first half of the lane axis, gate columns in the second half; padded
    rows/cols are zero and mathematically inert) stored in bf16 for native MXU
    throughput, plus an f32 bias (1, 2*H_pad)."""
    H = w_proj.shape[0]
    H_pad = _round_up(H, 128)
    w_cat = jnp.zeros((H_pad, 2 * H_pad), dtype=weight_dtype)
    w_cat = w_cat.at[:H, :H].set(w_proj.T.astype(weight_dtype))
    w_cat = w_cat.at[:H, H_pad:H_pad + H].set(w_gate.T.astype(weight_dtype))
    b_cat = jnp.zeros((1, 2 * H_pad), dtype=jnp.float32)
    b_cat = b_cat.at[0, :H].set(b_proj.astype(jnp.float32))
    b_cat = b_cat.at[0, H_pad:H_pad + H].set(b_gate.astype(jnp.float32))
    return w_cat, b_cat


def highway_forward(conv_out, w_cat, b_cat):
    """conv_out: (B, H) activations.  w_cat/b_cat from prepare_highway_params."""
    B, H = conv_out.shape
    H_pad, H2p = w_cat.shape
    assert H2p == 2 * H_pad and H <= H_pad
    out_dtype = conv_out.dtype
    out_isz = jnp.dtype(out_dtype).itemsize
    w_isz = jnp.dtype(w_cat.dtype).itemsize

    usable = _usable_vmem_bytes()
    TB = _pick_tb(B)
    B_pad = _round_up(B, TB)
    nb = B_pad // TB

    x_in = conv_out
    if B_pad != B:  # batch-only padding (feature axis left untouched)
        x_in = jnp.pad(conv_out, ((0, B_pad - B), (0, 0)))

    # ---- Path A: full weight resident in VMEM (single K step). -------------
    est_a = (2 * TB * H * 4                  # x tiles (f32, double-buffered)
             + 2 * H_pad * H2p * w_isz       # packed weight (2 pipeline bufs)
             + 2 * 8 * H2p * 4               # bias
             + 2 * TB * H2p * 4              # z + lane-padded x temporaries
             + 2 * TB * H_pad * out_isz)     # output tiles
    if est_a <= usable * 3 // 4:
        vmem_limit = min(max(2 * est_a, 32 * 1024 * 1024), usable)
        out_pad = pl.pallas_call(
            _highway_single_k_kernel,
            out_shape=jax.ShapeDtypeStruct((B_pad, H_pad), out_dtype),
            grid=(nb,),
            in_specs=[
                pl.BlockSpec((TB, H), lambda b: (b, 0)),       # x (LHS + residual)
                pl.BlockSpec((H_pad, H2p), lambda b: (0, 0)),  # resident weight
                pl.BlockSpec((1, H2p), lambda b: (0, 0)),      # bias
            ],
            out_specs=pl.BlockSpec((TB, H_pad), lambda b: (b, 0)),
            compiler_params=pltpu.CompilerParams(
                dimension_semantics=("parallel",),
                vmem_limit_bytes=int(vmem_limit),
            ),
        )(x_in, w_cat, b_cat)
        return out_pad[:B, :H]

    # ---- Path B: weight too large for VMEM -> K-tiled accumulation. --------
    tk = 128
    for cand in (2048, 1024, 512, 256, 128):
        if H_pad % cand == 0 and 2 * cand * H2p * w_isz <= usable // 3:
            tk = cand
            break
    nk = H_pad // tk

    # K tiling needs the feature dim padded to H_pad.  Rare: only hit when the
    # weight does not fit VMEM *and* H is not already a multiple of 128.
    if H != H_pad:
        x_in = jnp.pad(x_in, ((0, 0), (0, H_pad - H)))

    est_b = (2 * TB * tk * 4                 # x tiles
             + 2 * tk * H2p * w_isz          # weight tiles
             + 2 * 8 * H2p * 4               # bias
             + TB * H2p * 4                  # f32 accumulator scratch
             + TB * H_pad * 4                # f32 residual scratch
             + 2 * TB * H_pad * out_isz)     # output tiles
    vmem_limit = min(max(2 * est_b, 32 * 1024 * 1024), usable)

    out_pad = pl.pallas_call(
        _highway_ktiled_kernel,
        out_shape=jax.ShapeDtypeStruct((B_pad, H_pad), out_dtype),
        grid=(nb, nk),
        in_specs=[
            pl.BlockSpec((TB, tk), lambda b, k: (b, k)),     # x (K tiles)
            pl.BlockSpec((tk, H2p), lambda b, k: (k, 0)),    # weight (K tiles)
            pl.BlockSpec((1, H2p), lambda b, k: (0, 0)),     # bias
        ],
        out_specs=pl.BlockSpec((TB, H_pad), lambda b, k: (b, 0)),
        scratch_shapes=[
            pltpu.VMEM((TB, H2p), jnp.float32),    # accumulator
            pltpu.VMEM((TB, H_pad), jnp.float32),  # residual stash
        ],
        compiler_params=pltpu.CompilerParams(
            dimension_semantics=("parallel", "arbitrary"),
            vmem_limit_bytes=int(vmem_limit),
        ),
    )(x_in, w_cat, b_cat)
    return out_pad[:B, :H]


def highway_reference(conv_out, w_proj, b_proj, w_gate, b_gate):
    x_proj = jax.nn.relu(conv_out @ w_proj.T + b_proj)
    x_gate = jax.nn.sigmoid(conv_out @ w_gate.T + b_gate)
    return x_gate * x_proj + (1.0 - x_gate) * conv_out


if __name__ == "__main__":
    # NOTE: at (B=8, H=32) this kernel is pure launch/DMA-overhead bound; in a
    # real model it should be batched over many rows / fused with the producer.
    hidden_size = 32
    batch = 8

    key = jax.random.PRNGKey(0)
    k_x, k_wp, k_bp, k_wg, k_bg = jax.random.split(key, 5)

    # Deterministic synthetic parameters (PyTorch Linear shapes: (out,in), (out,)).
    bound = 1.0 / (hidden_size ** 0.5)
    conv_out = jax.random.normal(k_x, (batch, hidden_size), dtype=jnp.float32)
    w_proj = jax.random.uniform(k_wp, (hidden_size, hidden_size), jnp.float32, -bound, bound)
    b_proj = jax.random.uniform(k_bp, (hidden_size,), jnp.float32, -bound, bound)
    w_gate = jax.random.uniform(k_wg, (hidden_size, hidden_size), jnp.float32, -bound, bound)
    b_gate = jax.random.uniform(k_bg, (hidden_size,), jnp.float32, -bound, bound)

    # Init-time weight prep (transpose + concat + pad + bf16 cast, done once).
    w_cat, b_cat = prepare_highway_params(w_proj, b_proj, w_gate, b_gate)

    out = highway_forward(conv_out, w_cat, b_cat)
    out = jax.block_until_ready(out)

    ref = highway_reference(conv_out, w_proj, b_proj, w_gate, b_gate)
    assert out.shape == (batch, hidden_size)
    # bf16 matmul operands -> ~1e-2-level agreement with the f32 reference.
    assert jnp.allclose(out, ref, atol=2e-2, rtol=2e-2), "mismatch vs reference"

    print("KERNEL_OK")
</pallas_src>

<mosaic_0001>
module attributes {stable_mosaic.version = 11 : i64} {
  func.func @_highway_single_k_kernel(%arg0: i32, %arg1: memref<8x32xf32, #tpu.memory_space<vmem>>, %arg2: memref<128x256xbf16, #tpu.memory_space<vmem>>, %arg3: memref<1x256xf32, #tpu.memory_space<vmem>>, %arg4: memref<8x128xf32, #tpu.memory_space<vmem>>) attributes {dimension_semantics = [#tpu.dimension_semantics<parallel>], iteration_bounds = array<i64: 1>, scalar_prefetch = 0 : i64, scratch_operands = 0 : i64, tpu.core_type = #tpu.core_type<tc>, window_params = [{transform_indices = @transform_0, window_bounds = array<i64: 8, 32>}, {pipeline_mode = #tpu.pipeline_mode<synchronous>, transform_indices = @transform_1, window_bounds = array<i64: 128, 256>}, {pipeline_mode = #tpu.pipeline_mode<synchronous>, transform_indices = @transform_2, window_bounds = array<i64: 1, 256>}, {transform_indices = @transform_3, window_bounds = array<i64: 8, 128>}]} {
    %c0 = arith.constant 0 : index
    %c0_0 = arith.constant 0 : index
    %0 = vector.load %arg1[%c0, %c0_0] : memref<8x32xf32, #tpu.memory_space<vmem>>, vector<8x32xf32>
    %cst = arith.constant 0.000000e+00 : f32
    %1 = vector.broadcast %cst : f32 to vector<8x96xf32>
    %2 = tpu.concatenate %0, %1 in 1 : vector<8x32xf32>, vector<8x96xf32> -> vector<8x128xf32>
    %3 = arith.truncf %2 : vector<8x128xf32> to vector<8x128xbf16>
    %c0_1 = arith.constant 0 : index
    %c0_2 = arith.constant 0 : index
    %4 = vector.load %arg2[%c0_1, %c0_2] : memref<128x256xbf16, #tpu.memory_space<vmem>>, vector<128x256xbf16>
    %cst_3 = arith.constant dense<0.000000e+00> : vector<8x256xf32>
    %5 = tpu.matmul %3, %4, %cst_3 {dimension_numbers = #tpu.dot_dimension_numbers<[1], [0], [0], [1], [0, 0, 1, 1], [], []>} : vector<8x128xbf16>, vector<128x256xbf16>, vector<8x256xf32> -> vector<8x256xf32>
    %c0_4 = arith.constant 0 : index
    %c0_5 = arith.constant 0 : index
    %6 = vector.load %arg3[%c0_4, %c0_5] : memref<1x256xf32, #tpu.memory_space<vmem>>, vector<1x256xf32>
    %7 = vector.broadcast %6 : vector<1x256xf32> to vector<8x256xf32>
    %8 = arith.addf %5, %7 : vector<8x256xf32>
    %9 = vector.extract_strided_slice %8 {offsets = [0, 0], sizes = [8, 128], strides = [1, 1]} : vector<8x256xf32> to vector<8x128xf32>
    %cst_6 = arith.constant 0.000000e+00 : f32
    %10 = vector.broadcast %cst_6 : f32 to vector<8x128xf32>
    %11 = arith.maximumf %9, %10 : vector<8x128xf32>
    %12 = vector.extract_strided_slice %8 {offsets = [0, 128], sizes = [8, 128], strides = [1, 1]} : vector<8x256xf32> to vector<8x128xf32>
    %13 = arith.negf %12 : vector<8x128xf32>
    %14 = math.exp %13 : vector<8x128xf32>
    %cst_7 = arith.constant 1.000000e+00 : f32
    %15 = vector.broadcast %cst_7 : f32 to vector<8x128xf32>
    %16 = arith.addf %15, %14 : vector<8x128xf32>
    %17 = arith.divf %15, %16 : vector<8x128xf32>
    %18 = arith.subf %11, %2 : vector<8x128xf32>
    %19 = arith.mulf %17, %18 : vector<8x128xf32>
    %20 = arith.addf %19, %2 : vector<8x128xf32>
    %c0_8 = arith.constant 0 : index
    %c0_9 = arith.constant 0 : index
    %21 = vector.load %arg4[%c0_8, %c0_9] : memref<8x128xf32, #tpu.memory_space<vmem>>, vector<8x128xf32>
    tpu.vector_store %arg4[%c0_8, %c0_9], %20 {strides = array<i32>} : memref<8x128xf32, #tpu.memory_space<vmem>>, vector<8x128xf32>,
    return
  }
  func.func @transform_0(%arg0: i32) -> (i32, i32) {
    %c0_i32 = arith.constant 0 : i32
    %c0_i32_0 = arith.constant 0 : i32
    return %arg0, %c0_i32 : i32, i32
  }
  func.func @transform_1(%arg0: i32) -> (i32, i32) {
    %c0_i32 = arith.constant 0 : i32
    %c0_i32_0 = arith.constant 0 : i32
    %c0_i32_1 = arith.constant 0 : i32
    return %c0_i32, %c0_i32_0 : i32, i32
  }
  func.func @transform_2(%arg0: i32) -> (i32, i32) {
    %c0_i32 = arith.constant 0 : i32
    %c0_i32_0 = arith.constant 0 : i32
    %c0_i32_1 = arith.constant 0 : i32
    return %c0_i32, %c0_i32_0 : i32, i32
  }
  func.func @transform_3(%arg0: i32) -> (i32, i32) {
    %c0_i32 = arith.constant 0 : i32
    %c0_i32_0 = arith.constant 0 : i32
    return %arg0, %c0_i32 : i32, i32
  }
}

</mosaic_0001>

<llo_original>
// kernel: tpu_custom_call.1
$region0: #{tpu_custom_call.1}
  #allocation0 [shape = 'u32[]', space=smem, size = 0x4, offset = 0x4, fixed_abs, tag = 'smem constant byte address 0x4 - core index']
  #allocation1 [shape = 'u32[72,128]{1,0:T(1,128)}', space=vmem, size = 0x9000, scoped, tag = 'internal scratch']
  %s0 = inlined_call_operand.hbm [shape: f32[8,32], index: 0, kind: input, shape index: {}]
  %s1 = inlined_call_operand.hbm [shape: bf16[128,256], index: 1, kind: input, shape index: {}]
  %s2 = inlined_call_operand.hbm [shape: f32[1,256], index: 2, kind: input, shape index: {}]
  %s3 = inlined_call_operand.hbm [shape: f32[8,128], index: 3, kind: output, shape index: {}]
  %s4 = sld [smem:[#allocation0]]
  $region34: #{tpu_custom_call.1} parent=0
    _
  %s6 = ssub.s32 1, %s4
  %s7 = scalar_select 0, %s6, %s4
  $region1: #{tpu_custom_call.1} parent=0
    #allocation2 [shape = 'u8[4096]{0}', space=vmem, size = 0x1000, scoped, tag = 'input window, operand 0, single buffered']
    #allocation3 [shape = 's32[1]{0}', space=sflag, size = 0x4, scoped, tag = 'scoped memory for tpu_custom_call.1']
    #allocation4 [shape = 's32[1]{0}', space=sflag, size = 0x4, scoped, tag = 'scoped memory for tpu_custom_call.1']
    #allocation5 [shape = 'u8[65536]{0}', space=vmem, size = 0x10000, scoped, tag = 'input window, operand 1, single buffered']
    #allocation6 [shape = 's32[1]{0}', space=sflag, size = 0x4, scoped, tag = 'scoped memory for tpu_custom_call.1']
    #allocation7 [shape = 'u8[1024]{0}', space=vmem, size = 0x400, scoped, tag = 'input window, operand 2, single buffered']
    #allocation8 [shape = 'u8[4096]{0}', space=vmem, size = 0x1000, scoped, tag = 'output window, operand 0, single buffered']
    %8 = vsyncpa [#allocation3], 0
    %9 = vsyncpa [#allocation6], 0
    %10 = vsyncpa [#allocation4], 0
    // Predicated region
    $region2: #{tpu_custom_call.1} parent=1 // pred_check
      _
    $region3: #{tpu_custom_call.1} parent=1 // pred_check_branch
      %12 = sbr.rel (0) target = $region5
    $region4: #{tpu_custom_call.1} parent=1 // pred_region
      %14 = vsyncadd [#allocation3], 0
      %s16 = sshll.u32 %s0, 4
      %s17 = int_to_ptr.hbm [resolvable:$true] %s16
      %s18 = sshll.u32 [#allocation2], 4
      %s19 = int_to_ptr.vmem [resolvable:$true] %s18
      %21 = dma.hbm_to_vmem [thread:$0]  %s17, 128, %s19, [#allocation3]
    $region5: #{tpu_custom_call.1} parent=1 // pred_fallthru
      _
    // Predicated region
    $region6: #{tpu_custom_call.1} parent=1 // pred_check
      _
    $region7: #{tpu_custom_call.1} parent=1 // pred_check_branch
      %23 = sbr.rel (0) target = $region9
    $region8: #{tpu_custom_call.1} parent=1 // pred_region
      %25 = vsyncadd [#allocation6], 0
      %s26 = sshll.u32 %s1, 4
      %s27 = int_to_ptr.hbm [resolvable:$true] %s26
      %s28 = sshll.u32 [#allocation5], 4
      %s29 = int_to_ptr.vmem [resolvable:$true] %s28
      %34 = dma.hbm_to_vmem [thread:$0]  %s27, 2048, %s29, [#allocation6], 128, 128, 8
    $region9: #{tpu_custom_call.1} parent=1 // pred_fallthru
      _
    // Predicated region
    $region10: #{tpu_custom_call.1} parent=1 // pred_check
      _
    $region11: #{tpu_custom_call.1} parent=1 // pred_check_branch
      %36 = sbr.rel (0) target = $region13
    $region12: #{tpu_custom_call.1} parent=1 // pred_region
      %38 = vsyncadd [#allocation6], 0
      %s40 = sshll.u32 %s2, 4
      %s41 = int_to_ptr.hbm [resolvable:$true] %s40
      %s42 = sshll.u32 [#allocation7], 4
      %s43 = int_to_ptr.vmem [resolvable:$true] %s42
      %45 = dma.hbm_to_vmem [thread:$0]  %s41, 32, %s43, [#allocation6]
    $region13: #{tpu_custom_call.1} parent=1 // pred_fallthru
      _
    // Predicated region
    $region14: #{tpu_custom_call.1} parent=1 // pred_check
      _
    $region15: #{tpu_custom_call.1} parent=1 // pred_check_branch
      %47 = sbr.rel (0) target = $region17
    $region16: #{tpu_custom_call.1} parent=1 // pred_region
      %49 = dma.done [#allocation3], 128
    $region17: #{tpu_custom_call.1} parent=1 // pred_fallthru
      _
    // Predicated region
    $region18: #{tpu_custom_call.1} parent=1 // pred_check
      _
    $region19: #{tpu_custom_call.1} parent=1 // pred_check_branch
      %51 = sbr.rel (0) target = $region21
    $region20: #{tpu_custom_call.1} parent=1 // pred_region
      %53 = dma.done [#allocation6], 2048
    $region21: #{tpu_custom_call.1} parent=1 // pred_fallthru
      _
    // Predicated region
    $region22: #{tpu_custom_call.1} parent=1 // pred_check
      _
    $region23: #{tpu_custom_call.1} parent=1 // pred_check_branch
      %55 = sbr.rel (0) target = $region25
    $region24: #{tpu_custom_call.1} parent=1 // pred_region
      %57 = dma.done [#allocation6], 32
    $region25: #{tpu_custom_call.1} parent=1 // pred_fallthru
      _
    %v58 = vld [vmem:[#allocation2] sm:$0xff]
    %vm59 = vcmask 261120
    %v60 = vsel %vm59, %v58, 0.0
    %v61 = vpack.c.bf16 %v60, %v60
    %v62 = vld [vmem:[#allocation5] sm:$0xff]
    %v63 = vld [vmem:[#allocation5 + $0x8] sm:$0xff]
    %v64 = vld [vmem:[#allocation5 + $0x10] sm:$0xff]
    %v65 = vld [vmem:[#allocation5 + $0x18] sm:$0xff]
    %v66 = vld [vmem:[#allocation5 + $0x20] sm:$0xff]
    %v67 = vld [vmem:[#allocation5 + $0x28] sm:$0xff]
    %v68 = vld [vmem:[#allocation5 + $0x30] sm:$0xff]
    %v69 = vld [vmem:[#allocation5 + $0x38] sm:$0xff]
    %v70 = vld [vmem:[#allocation5 + $0x40] sm:$0xff]
    %v71 = vld [vmem:[#allocation5 + $0x48] sm:$0xff]
    %v72 = vld [vmem:[#allocation5 + $0x50] sm:$0xff]
    %v73 = vld [vmem:[#allocation5 + $0x58] sm:$0xff]
    %v74 = vld [vmem:[#allocation5 + $0x60] sm:$0xff]
    %v75 = vld [vmem:[#allocation5 + $0x68] sm:$0xff]
    %v76 = vld [vmem:[#allocation5 + $0x70] sm:$0xff]
    %v77 = vld [vmem:[#allocation5 + $0x78] sm:$0xff]
    %v78 = vld [vmem:[#allocation7] sm:$0x3]
    %v80 = vperm.slane %v78, 0
    %v81 = vperm.slane %v78, 1
    %v100 = vunpack.c.l.b16 %v62
    %v101 = vunpack.c.h.b16 %v62
    %v102 = vunpack.c.l.b16 %v63
    %v103 = vunpack.c.h.b16 %v63
    %v104 = vunpack.c.l.b16 %v64
    %v105 = vunpack.c.h.b16 %v64
    %v106 = vunpack.c.l.b16 %v65
    %v107 = vunpack.c.h.b16 %v65
    %v108 = vunpack.c.l.b16 %v66
    %v109 = vunpack.c.h.b16 %v66
    %v110 = vunpack.c.l.b16 %v67
    %v111 = vunpack.c.h.b16 %v67
    %v112 = vunpack.c.l.b16 %v68
    %v113 = vunpack.c.h.b16 %v68
    %v114 = vunpack.c.l.b16 %v69
    %v115 = vunpack.c.h.b16 %v69
    %v116 = vunpack.c.l.b16 %v70
    %v117 = vunpack.c.h.b16 %v70
    %v118 = vunpack.c.l.b16 %v71
    %v119 = vunpack.c.h.b16 %v71
    %v120 = vunpack.c.l.b16 %v72
    %v121 = vunpack.c.h.b16 %v72
    %v122 = vunpack.c.l.b16 %v73
    %v123 = vunpack.c.h.b16 %v73
    %v124 = vunpack.c.l.b16 %v74
    %v125 = vunpack.c.h.b16 %v74
    %v126 = vunpack.c.l.b16 %v75
    %v127 = vunpack.c.h.b16 %v75
    %v128 = vunpack.c.l.b16 %v76
    %v129 = vunpack.c.h.b16 %v76
    %v130 = vunpack.c.l.b16 %v77
    %v131 = vunpack.c.h.b16 %v77
    %v132 = vpack.c.b16 %v102, %v100
    %v133 = vpack.c.b16 %v103, %v101
    %v134 = vpack.c.b16 %v106, %v104
    %v135 = vpack.c.b16 %v107, %v105
    %v136 = vpack.c.b16 %v110, %v108
    %v137 = vpack.c.b16 %v111, %v109
    %v138 = vpack.c.b16 %v114, %v112
    %v139 = vpack.c.b16 %v115, %v113
    %v140 = vpack.c.b16 %v118, %v116
    %v141 = vpack.c.b16 %v119, %v117
    %v142 = vpack.c.b16 %v122, %v120
    %v143 = vpack.c.b16 %v123, %v121
    %v144 = vpack.c.b16 %v126, %v124
    %v145 = vpack.c.b16 %v127, %v125
    %v146 = vpack.c.b16 %v130, %v128
    %v147 = vpack.c.b16 %v131, %v129
    %164 = vmatpush.bf16.msra.mxu0 %v146
    %165 = vmatpush.bf16.msra.mxu0 %v144
    %166 = vmatpush.bf16.msra.mxu0 %v142
    %167 = vmatpush.bf16.msra.mxu0 %v140
    %168 = vmatpush.bf16.msra.mxu0 %v138
    %169 = vmatpush.bf16.msra.mxu0 %v136
    %170 = vmatpush.bf16.msra.mxu0 %v134
    %171 = vmatpush.bf16.msra.mxu0 %v132
    %172 = vmatmul.bf16.gmra.mxu0 %v61
    %v173 = vpop.f32.mrf.mxu0
    %v174 = vadd.f32 %v80, %v173
    %v175 = vpop.f32.mrf.mxu0
    %176 = vdwg.mxu0
    %177 = vmatpush.bf16.msra.mxu0 %v147
    %178 = vmatpush.bf16.msra.mxu0 %v145
    %179 = vmatpush.bf16.msra.mxu0 %v143
    %180 = vmatpush.bf16.msra.mxu0 %v141
    %181 = vmatpush.bf16.msra.mxu0 %v139
    %182 = vmatpush.bf16.msra.mxu0 %v137
    %183 = vmatpush.bf16.msra.mxu0 %v135
    %184 = vmatpush.bf16.msra.mxu0 %v133
    %185 = vmatmul.bf16.gmra.mxu0 %v61
    %v186 = vpop.f32.mrf.mxu0
    %v187 = vadd.f32 %v81, %v186
    %v188 = vpop.f32.mrf.mxu0
    %189 = vdwg.mxu0
    %v190 = vmax.f32 %v174, 0.0
    %v191 = vxor.u32 %v187, 2147483648
    %v192 = vmul.f32 %v191, 1.442695
    %v193 = vpow.pop %v192
    %v194 = vadd.f32 %v193, 1.0
    %v195 = vrcp.pop %v194
    %v196 = vmul.f32 %v194, %v195
    %v197 = vsub.f32 1.0, %v196
    %v198 = vmul.f32 %v195, %v197
    %v199 = vadd.f32 %v195, %v198
    %vm200 = vweird.f32 %v194
    %vm201 = vweird.f32 %v195
    %vm202 = vmor %vm200, %vm201
    %v203 = vsel %vm202, %v195, %v199
    %v204 = vand.u32 2147483647, %v194
    %vm205 = vcmp.eq.f32.partialorder %v204, 8.507059e+37
    %v206 = vand.u32 %v194, 2147483648
    %v207 = vor.u32 1.1754944e-38, %v206
    %v208 = vsel %vm205, %v207, %v203
    %v209 = vmul.f32 1.0, %v208
    %v210 = vsub.f32 %v190, %v60
    %v211 = vmul.f32 %v209, %v210
    %v212 = vadd.f32 %v211, %v60
    %213 = vst [vmem:[#allocation8] sm:$0xff] %v212
    // Predicated region
    $region26: #{tpu_custom_call.1} parent=1 // pred_check
      _
    $region27: #{tpu_custom_call.1} parent=1 // pred_check_branch
      %215 = sbr.rel (0) target = $region29
    $region28: #{tpu_custom_call.1} parent=1 // pred_region
      %217 = vsyncadd [#allocation4], 0
      %s219 = sshll.u32 [#allocation8], 4
      %s220 = int_to_ptr.vmem [resolvable:$true] %s219
      %s221 = sshll.u32 %s3, 4
      %s222 = int_to_ptr.hbm [resolvable:$true] %s221
      %224 = dma.vmem_to_hbm [thread:$0]  %s220, 128, %s222, [#allocation4]
    $region29: #{tpu_custom_call.1} parent=1 // pred_fallthru
      _
    // Predicated region
    $region30: #{tpu_custom_call.1} parent=1 // pred_check
      _
    $region31: #{tpu_custom_call.1} parent=1 // pred_check_branch
      %226 = sbr.rel (0) target = $region33
    $region32: #{tpu_custom_call.1} parent=1 // pred_region
      %228 = dma.done [#allocation4], 128
    $region33: #{tpu_custom_call.1} parent=1 // pred_fallthru
      _
    %229 = vsyncpa [#allocation3], 1
    %230 = vsyncpa [#allocation6], 1
    %231 = vsyncpa [#allocation4], 1

</llo_original>
